<compile_context>
chip_gen: v7x
topology: tpu7x:2x2x1
jax: 0.10.0
libtpu: 0.0.40
codegen_flags: <defaults>
</compile_context>

<pallas_src>
import jax
import jax.numpy as jnp
import numpy as np
from jax import lax
from jax.experimental import pallas as pl
from jax.experimental.pallas import tpu as pltpu


# ----------------------------- small helpers --------------------------------

def _round_up(n, m):
    return ((n + m - 1) // m) * m


def _cdiv(a, b):
    return -(-a // b)


def _vmem_budget_bytes():
    """Physical VMEM of the current TPU generation (fallback: v7x's 64 MiB)."""
    try:
        info = pltpu.get_tpu_info()
        cap = getattr(info, "vmem_capacity_bytes", None)
        if cap:
            return int(cap)
    except Exception:
        pass
    return 64 * 1024 * 1024


def _divisor_tiles(total):
    """Tile sizes (multiples of 128) that divide `total` (a multiple of 128)."""
    m = total // 128
    return sorted({d * 128 for d in range(1, m + 1) if m % d == 0}, reverse=True)


def _pick_tiles(B, K_pad, N_pad, in_bytes, out_bytes, budget, batch_block):
    """Choose (B_BLK, TILE_K, TILE_N) fitting the per-generation VMEM budget."""
    # Batch tile: prefer one that divides B (skips the jnp.pad HBM round-trip).
    if B > batch_block:
        b_blk = batch_block
        for cand in (batch_block, 384, 256, 128):
            if cand <= batch_block and B % cand == 0:
                b_blk = cand
                break
    else:
        b_blk = _round_up(B, 8)
    b_tiles = _cdiv(B, b_blk)

    n_cands = _divisor_tiles(N_pad)
    k_cands = _divisor_tiles(K_pad)

    # v7x has 2 TensorCores: make sure there are >=2 "parallel" grid steps
    # whenever the batch axis alone would give only one.
    if b_tiles == 1 and N_pad >= 256:
        n_cands = [n for n in n_cands if n <= N_pad // 2] or [128]

    def usage(tk, tn):
        return (2 * b_blk * tk * in_bytes        # x stream (double-buffered)
                + 2 * tk * tn * in_bytes         # weight tiles
                + 2 * 8 * tn * 4                 # bias (f32, sublane-padded)
                + 2 * b_blk * tn * out_bytes     # output tiles
                + b_blk * tn * 4)                # f32 accumulator scratch

    for tn in n_cands:                            # prefer wide (lane-dense) N
        for tk in k_cands:                        # then as much K as fits
            if usage(tk, tn) <= budget:
                return b_blk, tk, tn, usage(tk, tn)
    tk, tn = k_cands[-1], n_cands[-1]             # fallback: smallest tiles
    return b_blk, tk, tn, usage(tk, tn)


# ------------------------------- the kernel ---------------------------------

def _gemm_bias_kernel(x_ref, w_ref, b_ref, o_ref, acc_ref):
    # x_ref: (B_BLK, TILE_K)  w_ref: (TILE_K, TILE_N)  b_ref: (1, TILE_N) f32
    # o_ref: (B_BLK, TILE_N)  acc_ref: (B_BLK, TILE_N) f32 scratch
    @pl.when(pl.program_id(2) == 0)
    def _():
        acc_ref[...] = jnp.zeros_like(acc_ref)

    acc_ref[...] += jnp.dot(x_ref[...], w_ref[...],
                            preferred_element_type=jnp.float32)

    @pl.when(pl.program_id(2) == pl.num_programs(2) - 1)
    def _():
        o_ref[...] = (acc_ref[...] + b_ref[...]).astype(o_ref.dtype)


# --------------------- offline conv+fc fold (run once) ----------------------

def _fuse_branch(wc, bc, wf, bf, seq_len):
    """Fold Conv2d(1, F, (K, D)) + Linear(L, out) into one (S*D, F*out) weight
    and a (F*out,) bias.  Pure JAX; runs once when params are prepared."""
    F_, _, K, D = wc.shape
    out_size, L = wf.shape
    wck = jnp.transpose(wc[:, 0], (1, 2, 0)).astype(jnp.float32)    # (K, D, F)
    wfl = wf.T.astype(jnp.float32)                                  # (L, out)
    w_eff = jnp.zeros((seq_len, D, F_, out_size), jnp.float32)
    for k in range(K):            # K is 2 or 4: tiny static loop, offline
        w_eff = w_eff.at[k:k + L].add(jnp.einsum('df,lo->ldfo', wck[k], wfl))
    w_eff = w_eff.reshape(seq_len * D, F_ * out_size)
    b_eff = (bc.astype(jnp.float32)[:, None] * wfl.sum(0)[None, :]
             + bf.astype(jnp.float32)[None, :])                     # (F, out)
    return w_eff, b_eff.reshape(F_ * out_size)


def prepare_textcnn_params(params, seq_len, *, compute_dtype=jnp.bfloat16):
    """Fold both branches, concatenate, zero-pad K/N to multiples of 128 and
    cast to the MXU compute dtype.  Call once when params are loaded."""
    wc1, bc1, wf1, bf1 = params["wc1"], params["bc1"], params["wf1"], params["bf1"]
    wc2, bc2, wf2, bf2 = params["wc2"], params["bc2"], params["wf2"], params["bf2"]
    F_ = wc1.shape[0]
    D = wc1.shape[3]
    out_size = wf1.shape[0]
    K1, K2 = wc1.shape[2], wc2.shape[2]
    # fc_j in_features must equal S - K_j + 1 (the module sets S = 2*filter_num)
    assert wf1.shape[1] == seq_len - K1 + 1, "fc1 in_features must be seq_len - k1 + 1"
    assert wf2.shape[1] == seq_len - K2 + 1, "fc2 in_features must be seq_len - k2 + 1"

    w1, b1 = _fuse_branch(wc1, bc1, wf1, bf1, seq_len)
    w2, b2 = _fuse_branch(wc2, bc2, wf2, bf2, seq_len)
    w_cat = jnp.concatenate([w1, w2], axis=1)        # (S*D, 2F*out)
    b_cat = jnp.concatenate([b1, b2])[None, :]       # (1, 2F*out)

    Kdim = seq_len * D
    N = 2 * F_ * out_size
    if Kdim * N * jnp.dtype(compute_dtype).itemsize > 2 * 1024 ** 3:
        # TODO(synk): use a two-stage conv-GEMM + fc-GEMM kernel for configs
        #             where the folded weight does not fit HBM.
        raise NotImplementedError("folded TextCNN weight too large for the fold path")

    K_pad = _round_up(Kdim, 128)
    N_pad = _round_up(N, 128)
    w_cat = jnp.pad(w_cat, ((0, K_pad - Kdim), (0, N_pad - N))).astype(compute_dtype)
    b_cat = jnp.pad(b_cat, ((0, 0), (0, N_pad - N))).astype(jnp.float32)
    return {
        "w": w_cat, "b": b_cat,
        "k_dim": Kdim, "n_dim": N,
        "rows_out": 2 * F_, "out_size": out_size,
        "compute_dtype": compute_dtype,
    }


# ------------------------------ forward pass --------------------------------

def textcnn_forward(x, folded, *, out_dtype=jnp.float32, batch_block=512):
    """TextCNN forward.  Inputs/weights are consumed in folded['compute_dtype']
    (default bf16), accumulation is f32, output is `out_dtype` (default f32)."""
    B, S, D = x.shape
    Kdim, N = folded["k_dim"], folded["n_dim"]
    assert S * D == Kdim, "x shape inconsistent with prepared params"
    compute_dtype = folded["compute_dtype"]
    w_cat, b_cat = folded["w"], folded["b"]
    K_pad, N_pad = w_cat.shape

    in_bytes = jnp.dtype(compute_dtype).itemsize
    out_bytes = jnp.dtype(out_dtype).itemsize
    vmem_cap = _vmem_budget_bytes()
    budget = int(vmem_cap * 0.75)                     # ~25% headroom
    b_blk, tk, tn, usage = _pick_tiles(B, K_pad, N_pad, in_bytes, out_bytes,
                                       budget, batch_block)

    B_pad = _round_up(B, b_blk)
    x_flat = x.reshape(B, Kdim).astype(compute_dtype)
    if B_pad != B or K_pad != Kdim:
        x_flat = jnp.pad(x_flat, ((0, B_pad - B), (0, K_pad - Kdim)))

    b_tiles = B_pad // b_blk
    n_tiles = N_pad // tn
    k_tiles = K_pad // tk
    grid = (b_tiles, n_tiles, k_tiles)

    def _spec(shape, index_map, invariant):
        # Grid-invariant operands get a single VMEM buffer (no wasted double
        # buffer) -- matters for a resident weight on v7x's 64 MiB VMEM.
        if invariant and hasattr(pl, "Buffered"):
            return pl.BlockSpec(shape, index_map, pipeline_mode=pl.Buffered(1))
        return pl.BlockSpec(shape, index_map)

    in_specs = [
        pl.BlockSpec((b_blk, tk), lambda i, j, k: (i, k)),              # x
        _spec((tk, tn), lambda i, j, k: (k, j),
              invariant=(n_tiles == 1 and k_tiles == 1)),               # W
        _spec((1, tn), lambda i, j, k: (0, j),
              invariant=(n_tiles == 1)),                                # bias
    ]
    out_spec = pl.BlockSpec((b_blk, tn), lambda i, j, k: (i, j))

    vmem_limit = int(min(vmem_cap * 0.9,
                         max(int(usage * 1.5), 32 * 1024 * 1024)))
    flops = 2 * B_pad * K_pad * N_pad
    bytes_accessed = int(in_bytes * (B_pad * K_pad * n_tiles
                                     + K_pad * N_pad * b_tiles)
                         + out_bytes * B_pad * N_pad + 4 * N_pad)

    out_flat = pl.pallas_call(
        _gemm_bias_kernel,
        out_shape=jax.ShapeDtypeStruct((B_pad, N_pad), out_dtype),
        grid_spec=pltpu.PrefetchScalarGridSpec(
            num_scalar_prefetch=0,
            grid=grid,
            in_specs=in_specs,
            out_specs=out_spec,
            scratch_shapes=[pltpu.VMEM((b_blk, tn), jnp.float32)],
        ),
        compiler_params=pltpu.CompilerParams(
            dimension_semantics=("parallel", "parallel", "arbitrary"),
            vmem_limit_bytes=vmem_limit,
        ),
        cost_estimate=pl.CostEstimate(flops=flops, transcendentals=0,
                                      bytes_accessed=bytes_accessed),
    )(x_flat, w_cat, b_cat)

    # Drop padding and restore the PyTorch (B, 2F, out) layout.
    return out_flat[:B, :N].reshape(B, folded["rows_out"], folded["out_size"])


# ------------------------- pure-JAX reference model --------------------------

def textcnn_ref(x, params):
    """Pure-JAX reference matching the PyTorch forward (eval mode)."""
    x4 = x[:, None, :, :]                             # (B, 1, S, D) = NCHW

    def branch(wc, bc, wf, bf):
        c = lax.conv_general_dilated(
            x4, wc, window_strides=(1, 1), padding="VALID",
            dimension_numbers=("NCHW", "OIHW", "NCHW"))
        c = c + bc[None, :, None, None]               # (B, F, L, 1)
        c = c.reshape(c.shape[0], c.shape[1], -1)     # (B, F, L)
        return c @ wf.T + bf                          # (B, F, out)

    out1 = branch(params["wc1"], params["bc1"], params["wf1"], params["bf1"])
    out2 = branch(params["wc2"], params["bc2"], params["wf2"], params["bf2"])
    return jnp.concatenate([out1, out2], axis=1)


# ----------------------------------- demo ------------------------------------

if __name__ == "__main__":
    # Small shapes consistent with the module: seq_len = 2 * filter_num.
    B, S, D = 2, 16, 32        # batch, seq_len, input_size
    F = 8                      # filter_num
    out_size = 32              # output_size
    K1, K2 = 2, 4              # kernel_lst
    L1, L2 = S - K1 + 1, S - K2 + 1

    key = jax.random.PRNGKey(0)
    ks = jax.random.split(key, 9)
    params = {
        "wc1": jax.random.normal(ks[0], (F, 1, K1, D), jnp.float32) * 0.05,
        "bc1": jax.random.normal(ks[1], (F,), jnp.float32) * 0.05,
        "wf1": jax.random.normal(ks[2], (out_size, L1), jnp.float32) * 0.05,
        "bf1": jax.random.normal(ks[3], (out_size,), jnp.float32) * 0.05,
        "wc2": jax.random.normal(ks[4], (F, 1, K2, D), jnp.float32) * 0.05,
        "bc2": jax.random.normal(ks[5], (F,), jnp.float32) * 0.05,
        "wf2": jax.random.normal(ks[6], (out_size, L2), jnp.float32) * 0.05,
        "bf2": jax.random.normal(ks[7], (out_size,), jnp.float32) * 0.05,
    }
    x = jax.random.normal(ks[8], (B, S, D), jnp.float32)

    ref = textcnn_ref(x, params)

    # f32-compute path: tight parity with the PyTorch/XLA reference.
    folded_f32 = prepare_textcnn_params(params, S, compute_dtype=jnp.float32)
    fwd_f32 = jax.jit(lambda xx: textcnn_forward(xx, folded_f32))
    out_f32 = jax.block_until_ready(fwd_f32(x))
    assert out_f32.shape == (B, 2 * F, out_size)
    np.testing.assert_allclose(np.asarray(out_f32), np.asarray(ref),
                               atol=2e-4, rtol=2e-4)

    # bf16-input / f32-accumulate path: default performance path (MXU-native
    # on v5e/v6e/v7x, halves HBM/VMEM bytes for x and W).
    folded_bf16 = prepare_textcnn_params(params, S, compute_dtype=jnp.bfloat16)
    fwd_bf16 = jax.jit(lambda xx: textcnn_forward(xx, folded_bf16))
    out_bf16 = jax.block_until_ready(fwd_bf16(x))
    assert out_bf16.shape == (B, 2 * F, out_size)
    np.testing.assert_allclose(np.asarray(out_bf16), np.asarray(ref),
                               atol=1e-2, rtol=5e-2)

    print("KERNEL_OK")
</pallas_src>

<mosaic_0001>
module attributes {stable_mosaic.version = 11 : i64} {
  func.func @_gemm_bias_kernel(%arg0: i32, %arg1: i32, %arg2: i32, %arg3: memref<8x512xf32, #tpu.memory_space<vmem>>, %arg4: memref<512x256xf32, #tpu.memory_space<vmem>>, %arg5: memref<1x256xf32, #tpu.memory_space<vmem>>, %arg6: memref<8x256xf32, #tpu.memory_space<vmem>>, %arg7: memref<8x256xf32, #tpu.memory_space<vmem>>) attributes {dimension_semantics = [#tpu.dimension_semantics<parallel>, #tpu.dimension_semantics<parallel>, #tpu.dimension_semantics<arbitrary>], iteration_bounds = array<i64: 1, 2, 1>, scalar_prefetch = 0 : i64, scratch_operands = 1 : i64, tpu.core_type = #tpu.core_type<tc>, window_params = [{transform_indices = @transform_0, window_bounds = array<i64: 8, 512>}, {transform_indices = @transform_1, window_bounds = array<i64: 512, 256>}, {transform_indices = @transform_2, window_bounds = array<i64: 1, 256>}, {transform_indices = @transform_3, window_bounds = array<i64: 8, 256>}]} {
    %c0_i32 = arith.constant 0 : i32
    %0 = arith.cmpi eq, %arg2, %c0_i32 : i32
    %1 = arith.extui %0 : i1 to i32
    %c0_i32_0 = arith.constant 0 : i32
    %2 = arith.cmpi ne, %1, %c0_i32_0 : i32
    scf.if %2 {
      %cst_10 = arith.constant 0.000000e+00 : f32
      %12 = vector.broadcast %cst_10 : f32 to vector<8x256xf32>
      %c0_11 = arith.constant 0 : index
      %c0_12 = arith.constant 0 : index
      %13 = vector.load %arg7[%c0_11, %c0_12] : memref<8x256xf32, #tpu.memory_space<vmem>>, vector<8x256xf32>
      tpu.vector_store %arg7[%c0_11, %c0_12], %12 {strides = array<i32>} : memref<8x256xf32, #tpu.memory_space<vmem>>, vector<8x256xf32>,
    } else {
    }
    %c0 = arith.constant 0 : index
    %c0_1 = arith.constant 0 : index
    %3 = vector.load %arg7[%c0, %c0_1] : memref<8x256xf32, #tpu.memory_space<vmem>>, vector<8x256xf32>
    %c0_2 = arith.constant 0 : index
    %c0_3 = arith.constant 0 : index
    %4 = vector.load %arg3[%c0_2, %c0_3] : memref<8x512xf32, #tpu.memory_space<vmem>>, vector<8x512xf32>
    %c0_4 = arith.constant 0 : index
    %c0_5 = arith.constant 0 : index
    %5 = vector.load %arg4[%c0_4, %c0_5] : memref<512x256xf32, #tpu.memory_space<vmem>>, vector<512x256xf32>
    %cst = arith.constant dense<0.000000e+00> : vector<8x256xf32>
    %6 = tpu.matmul %4, %5, %cst {dimension_numbers = #tpu.dot_dimension_numbers<[1], [0], [0], [1], [0, 0, 1, 1], [], []>} : vector<8x512xf32>, vector<512x256xf32>, vector<8x256xf32> -> vector<8x256xf32>
    %7 = arith.addf %3, %6 : vector<8x256xf32>
    %c0_6 = arith.constant 0 : index
    %c0_7 = arith.constant 0 : index
    %8 = vector.load %arg7[%c0_6, %c0_7] : memref<8x256xf32, #tpu.memory_space<vmem>>, vector<8x256xf32>
    tpu.vector_store %arg7[%c0_6, %c0_7], %7 {strides = array<i32>} : memref<8x256xf32, #tpu.memory_space<vmem>>, vector<8x256xf32>,
    %c0_i32_8 = arith.constant 0 : i32
    %9 = arith.cmpi eq, %arg2, %c0_i32_8 : i32
    %10 = arith.extui %9 : i1 to i32
    %c0_i32_9 = arith.constant 0 : i32
    %11 = arith.cmpi ne, %10, %c0_i32_9 : i32
    scf.if %11 {
      %c0_10 = arith.constant 0 : index
      %c0_11 = arith.constant 0 : index
      %12 = vector.load %arg7[%c0_10, %c0_11] : memref<8x256xf32, #tpu.memory_space<vmem>>, vector<8x256xf32>
      %c0_12 = arith.constant 0 : index
      %c0_13 = arith.constant 0 : index
      %13 = vector.load %arg5[%c0_12, %c0_13] : memref<1x256xf32, #tpu.memory_space<vmem>>, vector<1x256xf32>
      %14 = vector.broadcast %13 : vector<1x256xf32> to vector<8x256xf32>
      %15 = arith.addf %12, %14 : vector<8x256xf32>
      %c0_14 = arith.constant 0 : index
      %c0_15 = arith.constant 0 : index
      %16 = vector.load %arg6[%c0_14, %c0_15] : memref<8x256xf32, #tpu.memory_space<vmem>>, vector<8x256xf32>
      tpu.vector_store %arg6[%c0_14, %c0_15], %15 {strides = array<i32>} : memref<8x256xf32, #tpu.memory_space<vmem>>, vector<8x256xf32>,
    } else {
    }
    return
  }
  func.func @transform_0(%arg0: i32, %arg1: i32, %arg2: i32) -> (i32, i32) {
    %c0_i32 = arith.constant 0 : i32
    return %arg0, %arg2 : i32, i32
  }
  func.func @transform_1(%arg0: i32, %arg1: i32, %arg2: i32) -> (i32, i32) {
    %c0_i32 = arith.constant 0 : i32
    return %arg2, %arg1 : i32, i32
  }
  func.func @transform_2(%arg0: i32, %arg1: i32, %arg2: i32) -> (i32, i32) {
    %c0_i32 = arith.constant 0 : i32
    %c0_i32_0 = arith.constant 0 : i32
    return %c0_i32, %arg1 : i32, i32
  }
  func.func @transform_3(%arg0: i32, %arg1: i32, %arg2: i32) -> (i32, i32) {
    %c0_i32 = arith.constant 0 : i32
    return %arg0, %arg1 : i32, i32
  }
}

</mosaic_0001>

<llo_original>
// kernel: _lambda_.1
$region0: #{_lambda_.1}
  #allocation0 [shape = 'u32[]', space=smem, size = 0x4, offset = 0x4, fixed_abs, tag = 'smem constant byte address 0x4 - core index']
  #allocation1 [shape = 'u32[144,128]{1,0:T(1,128)}', space=vmem, size = 0x12000, scoped, tag = 'internal scratch']
  #allocation2 [shape = 'f32[8,256]{1,0:T(8,128)}', space=vmem, size = 0x2000, scoped, tag = 'scratch operand']
  %s0 = inlined_call_operand.vmem [shape: f32[8,512], index: 0, kind: input, shape index: {}]
  %s1 = inlined_call_operand.hbm [shape: f32[512,512], index: 1, kind: input, shape index: {}]
  %s2 = inlined_call_operand.vmem [shape: f32[1,512], index: 2, kind: input, shape index: {}]
  %s3 = inlined_call_operand.vmem [shape: f32[8,512], index: 3, kind: output, shape index: {}]
  %s4 = sld [smem:[#allocation0]]
  $region57: #{_lambda_.1} parent=0
    _
  %s6 = ssub.s32 1, %s4
  %s7 = scalar_select 0, %s6, %s4
  $region1: #{_lambda_.1} parent=0
    #allocation3 [shape = 'u8[1048576]{0}', space=vmem, size = 0x100000, scoped, tag = 'input window, operand 1']
    #allocation4 [shape = 's32[2]{0}', space=sflag, size = 0x8, scoped, tag = 'scoped memory for _lambda_.1']
    %8 = vsyncpa [#allocation4], 0
    %s9 = scalar_lea.sflag [#allocation4], 1
    %10 = vsyncpa %s9, 0
    loop: start=0, step=1, limit=4
    $region2: #{_lambda_.1} parent=1 // loop_pre_header
      _
    $region3: #{_lambda_.1} parent=1 // loop_header
      %s12 = sphi 0, %s16
      %p13 = scmp.ge.s32.totalorder %s12, 4
      %s19 = sphi 0, %s38
      %s20 = sphi 0, %s34
      %s21 = sphi 0, %s30
      %s22 = sphi 0, %s19
      %s23 = sphi 0, %s20
      %s24 = sphi 0, %s21
      %s25 = sphi 0, %s22
      %s26 = sphi 0, %s23
      %s27 = sphi 0, %s24
      %s43 = sphi 0, %s45
      %s46 = sphi 0, %s43
      %s47 = sphi 0, %s46
      %s63 = sphi 0, %s47
      %s71 = sphi 0, %s73
      %s74 = sphi 0, %s71
      %s75 = sphi 0, %s74
      %s91 = sphi 0, %s75
      %s97 = sphi 0, %s99
      %s100 = sphi 0, %s97
      %s101 = sphi 0, %s100
      %s117 = sphi 0, %s101
      %s125 = sphi 0, %s127
      %s128 = sphi 0, %s125
      %s129 = sphi 0, %s128
      %s145 = sphi 0, %s129
    $region4: #{_lambda_.1} parent=1 // loop_header_branch
      %15 = sbr.rel (%p13) target = $region8
    $region5: #{_lambda_.1} parent=1 // loop_body
      %s17 = ssub.s32 %s12, 1
      %s18 = ssub.s32 %s12, 2
      %s28 = sadd.s32 1, %s21
      %p29 = scmp.ge.s32.totalorder %s28, 1
      %s30 = scalar_select %p29, 0, %s28
      %s31 = sadd.s32 1, %s20
      %s32 = scalar_select %p29, %s31, %s20
      %p33 = scmp.ge.s32.totalorder %s32, 2
      %s34 = scalar_select %p33, 0, %s32
      %s35 = sadd.s32 1, %s19
      %s36 = scalar_select %p33, %s35, %s19
      %p37 = scmp.ge.s32.totalorder %s36, 1
      %s38 = scalar_select %p37, 0, %s36
      %s39 = ssub.s32 %s19, %s38
      %s40 = ssub.s32 %s21, %s30
      %s41 = sor.u32 %s39, %s40
      %p42 = scmp.eq.s32.totalorder %s41, 0
      %s44 = sadd.s32 %s43, 1
      %s45 = scalar_select %p42, %s43, %s44
      %p48 = pneg %p42
      %p49 = scmp.eq.s32.totalorder %s12, 1
      %p50 = por %p48, %p49
      %p51 = scmp.ne.s32.totalorder %s43, %s46
      %p52 = scmp.eq.s32.totalorder %s12, 0
      %p53 = por %p51, %p52
      %p54 = scmp.ne.s32.totalorder %s43, %s46
      %p55 = scmp.eq.s32.totalorder %s17, 1
      %p56 = por %p54, %p55
      %p57 = scmp.ne.s32.totalorder %s46, %s47
      %p58 = scmp.eq.s32.totalorder %s17, 0
      %p59 = por %p57, %p58
      %p60 = scmp.ne.s32.totalorder %s46, %s47
      %p61 = scmp.eq.s32.totalorder %s18, 1
      %p62 = por %p60, %p61
      %p64 = scmp.ne.s32.totalorder %s47, %s63
      %p65 = scmp.eq.s32.totalorder %s18, 0
      %p66 = por %p64, %p65
      %s67 = ssub.s32 %s21, %s30
      %s68 = ssub.s32 %s20, %s34
      %s69 = sor.u32 %s67, %s68
      %p70 = scmp.eq.s32.totalorder %s69, 0
      %s72 = sadd.s32 %s71, 1
      %s73 = scalar_select %p70, %s71, %s72
      %p76 = pneg %p70
      %p77 = scmp.eq.s32.totalorder %s12, 1
      %p78 = por %p76, %p77
      %p79 = scmp.ne.s32.totalorder %s71, %s74
      %p80 = scmp.eq.s32.totalorder %s12, 0
      %p81 = por %p79, %p80
      %p82 = scmp.ne.s32.totalorder %s71, %s74
      %p83 = scmp.eq.s32.totalorder %s17, 1
      %p84 = por %p82, %p83
      %p85 = scmp.ne.s32.totalorder %s74, %s75
      %p86 = scmp.eq.s32.totalorder %s17, 0
      %p87 = por %p85, %p86
      %p88 = scmp.ne.s32.totalorder %s74, %s75
      %p89 = scmp.eq.s32.totalorder %s18, 1
      %p90 = por %p88, %p89
      %p92 = scmp.ne.s32.totalorder %s75, %s91
      %p93 = scmp.eq.s32.totalorder %s18, 0
      %p94 = por %p92, %p93
      %s95 = ssub.s32 %s20, %s34
      %p96 = scmp.eq.s32.totalorder %s95, 0
      %s98 = sadd.s32 %s97, 1
      %s99 = scalar_select %p96, %s97, %s98
      %p102 = pneg %p96
      %p103 = scmp.eq.s32.totalorder %s12, 1
      %p104 = por %p102, %p103
      %p105 = scmp.ne.s32.totalorder %s97, %s100
      %p106 = scmp.eq.s32.totalorder %s12, 0
      %p107 = por %p105, %p106
      %p108 = scmp.ne.s32.totalorder %s97, %s100
      %p109 = scmp.eq.s32.totalorder %s17, 1
      %p110 = por %p108, %p109
      %p111 = scmp.ne.s32.totalorder %s100, %s101
      %p112 = scmp.eq.s32.totalorder %s17, 0
      %p113 = por %p111, %p112
      %p114 = scmp.ne.s32.totalorder %s100, %s101
      %p115 = scmp.eq.s32.totalorder %s18, 1
      %p116 = por %p114, %p115
      %p118 = scmp.ne.s32.totalorder %s101, %s117
      %p119 = scmp.eq.s32.totalorder %s18, 0
      %p120 = por %p118, %p119
      %s121 = ssub.s32 %s19, %s38
      %s122 = ssub.s32 %s20, %s34
      %s123 = sor.u32 %s121, %s122
      %p124 = scmp.eq.s32.totalorder %s123, 0
      %s126 = sadd.s32 %s125, 1
      %s127 = scalar_select %p124, %s125, %s126
      %p130 = pneg %p124
      %p131 = scmp.eq.s32.totalorder %s12, 1
      %p132 = por %p130, %p131
      %p133 = scmp.ne.s32.totalorder %s125, %s128
      %p134 = scmp.eq.s32.totalorder %s12, 0
      %p135 = por %p133, %p134
      %p136 = scmp.ne.s32.totalorder %s125, %s128
      %p137 = scmp.eq.s32.totalorder %s17, 1
      %p138 = por %p136, %p137
      %p139 = scmp.ne.s32.totalorder %s128, %s129
      %p140 = scmp.eq.s32.totalorder %s17, 0
      %p141 = por %p139, %p140
      %p142 = scmp.ne.s32.totalorder %s128, %s129
      %p143 = scmp.eq.s32.totalorder %s18, 1
      %p144 = por %p142, %p143
      %p146 = scmp.ne.s32.totalorder %s129, %s145
      %p147 = scmp.eq.s32.totalorder %s18, 0
      %p148 = por %p146, %p147
      %p149 = scmp.le.s32.totalorder 1, %s12
      %p150 = scmp.lt.s32.totalorder %s12, 3
      %p151 = pnand %p149, %p150
      %p152 = pneg %p151
      // Predicated region
      $region9: #{_lambda_.1} parent=5 // pred_check
        _
      $region10: #{_lambda_.1} parent=5 // pred_check_branch
        %154 = sbr.rel (%p151) target = $region12
      $region11: #{_lambda_.1} parent=5 // pred_region
        %s155 = ssub.s32 %s12, 1
        // Predicated region
        $region13: #{_lambda_.1} parent=11 // pred_check
          %p156 = pneg %p59
        $region14: #{_lambda_.1} parent=11 // pred_check_branch
          %158 = sbr.rel (%p156) target = $region16
        $region15: #{_lambda_.1} parent=11 // pred_region
          %s159 = smul.u32 4, %s24
          %p160 = scmp.lt.s32.totalorder %s22, 0
          %s161 = scalar_select %p160, %s22, 0
          %p162 = scmp.lt.s32.totalorder %s159, 3
          %s163 = scalar_select %p162, %s159, 3
          %s164 = smul.addr %s161, 4
          %s165 = sadd.s32 %s163, %s164
          %s166 = smul.addr %s165, 8
          %s167 = scalar_lea.vmem %s0, %s166
          %s168 = smul.u32 4, %s24
        $region16: #{_lambda_.1} parent=11 // pred_fallthru
          _
      $region12: #{_lambda_.1} parent=5 // pred_fallthru
        _
      %p169 = scmp.lt.s32.totalorder %s12, 2
      // Predicated region
      $region17: #{_lambda_.1} parent=5 // pred_check
        %p170 = pneg %p169
      $region18: #{_lambda_.1} parent=5 // pred_check_branch
        %172 = sbr.rel (%p170) target = $region20
      $region19: #{_lambda_.1} parent=5 // pred_region
        // Predicated region
        $region21: #{_lambda_.1} parent=19 // pred_check
          %p173 = pneg %p81
        $region22: #{_lambda_.1} parent=19 // pred_check_branch
          %175 = sbr.rel (%p173) target = $region24
        $region23: #{_lambda_.1} parent=19 // pred_region
          %s176 = sand.u32 %s71, 1
          %s177 = scalar_lea.sflag [#allocation4], %s176
          %s178 = sand.u32 %s71, 1
          %s179 = smul.addr %s178, 1024
          %s180 = scalar_lea.vmem [#allocation3], %s179
          %s181 = smul.u32 64, %s21
          %s182 = smul.u32 2, %s20
          %s184 = ssub.s32 16384, 16384
          %185 = vsyncadd %s177, %s184
          %s186 = smul.addr %s181, 4
          %s187 = sadd.s32 %s182, %s186
          %s188 = smul.addr %s187, 128
          %s189 = scalar_lea.hbm %s1, %s188
          %s190 = sshll.u32 %s180, 4
          %s191 = int_to_ptr.vmem [resolvable:$true] %s190
          %196 = dma.hbm_to_vmem [thread:$0]  %s189, 16384, %s191, %s177, 512, 256, 16
        $region24: #{_lambda_.1} parent=19 // pred_fallthru
          _
        // Predicated region
        $region25: #{_lambda_.1} parent=19 // pred_check
          %p197 = pneg %p107
        $region26: #{_lambda_.1} parent=19 // pred_check_branch
          %199 = sbr.rel (%p197) target = $region28
        $region27: #{_lambda_.1} parent=19 // pred_region
          %s200 = smul.u32 2, %s20
          %p201 = scmp.lt.s32.totalorder %s200, 3
          %s202 = scalar_select %p201, %s200, 3
          %s203 = scalar_lea.vmem %s2, %s202
          %s204 = smul.u32 2, %s20
        $region28: #{_lambda_.1} parent=19 // pred_fallthru
          _
      $region20: #{_lambda_.1} parent=5 // pred_fallthru
        _
      %p205 = scmp.le.s32.totalorder 1, %s12
      %p206 = scmp.lt.s32.totalorder %s12, 3
      %p207 = pnand %p205, %p206
      %p208 = pneg %p207
      // Predicated region
      $region29: #{_lambda_.1} parent=5 // pred_check
        _
      $region30: #{_lambda_.1} parent=5 // pred_check_branch
        %210 = sbr.rel (%p207) target = $region32
      $region31: #{_lambda_.1} parent=5 // pred_region
        %s211 = ssub.s32 %s12, 1
        %s212 = sand.u32 %s74, 1
        %s213 = scalar_lea.sflag [#allocation4], %s212
        %s214 = sand.u32 %s74, 1
        %s215 = smul.addr %s214, 1024
        %s216 = scalar_lea.vmem [#allocation3], %s215
        // Predicated region
        $region33: #{_lambda_.1} parent=31 // pred_check
          %p217 = pneg %p87
        $region34: #{_lambda_.1} parent=31 // pred_check_branch
          %219 = sbr.rel (%p217) target = $region36
        $region35: #{_lambda_.1} parent=31 // pred_region
          %220 = dma.done %s213, 16384
        $region36: #{_lambda_.1} parent=31 // pred_fallthru
          _
        %s221 = smul.u32 4, %s24
        %p222 = scmp.lt.s32.totalorder %s22, 0
        %s223 = scalar_select %p222, %s22, 0
        %p224 = scmp.lt.s32.totalorder %s221, 3
        %s225 = scalar_select %p224, %s221, 3
        %s226 = smul.addr %s223, 4
        %s227 = sadd.s32 %s225, %s226
        %s228 = smul.addr %s227, 8
        %s229 = scalar_lea.vmem %s0, %s228
        %p230 = pneg %p59
        %p231 = pneg %p56
        %s232 = sand.u32 %s74, 1
        %s233 = scalar_lea.sflag [#allocation4], %s232
        %s234 = sand.u32 %s74, 1
        %s235 = smul.addr %s234, 1024
        %s236 = scalar_lea.vmem [#allocation3], %s235
        %p237 = pneg %p87
        %p238 = pneg %p84
        %s239 = smul.u32 2, %s23
        %p240 = scmp.lt.s32.totalorder %s239, 3
        %s241 = scalar_select %p240, %s239, 3
        %s242 = scalar_lea.vmem %s2, %s241
        %p243 = pneg %p113
        %p244 = pneg %p110
        %p245 = pneg %p141
        %p246 = pneg %p138
        %s247 = smul.u32 2, %s23
        %p248 = scmp.lt.s32.totalorder %s22, 0
        %s249 = scalar_select %p248, %s22, 0
        %p250 = scmp.lt.s32.totalorder %s247, 3
        %s251 = scalar_select %p250, %s247, 3
        %s252 = smul.addr %s249, 4
        %s253 = sadd.s32 %s251, %s252
        %s254 = smul.addr %s253, 8
        %s255 = scalar_lea.vmem %s3, %s254
        %s256 = smul.u32 4, %s24
        %p257 = scmp.lt.s32.totalorder %s22, 0
        %s258 = scalar_select %p257, %s22, 0
        %p259 = scmp.lt.s32.totalorder %s256, 3
        %s260 = scalar_select %p259, %s256, 3
        %s261 = smul.addr %s258, 4
        %s262 = sadd.s32 %s260, %s261
        %s263 = smul.addr %s262, 8
        %s264 = scalar_lea.vmem %s0, %s263
        %s265 = smul.u32 4, %s24
        %s266 = smul.u32 64, %s24
        %s267 = smul.u32 2, %s23
        %s268 = smul.u32 2, %s23
        %p269 = scmp.lt.s32.totalorder %s268, 3
        %s270 = scalar_select %p269, %s268, 3
        %s271 = scalar_lea.vmem %s2, %s270
        %s272 = smul.u32 2, %s23
        %s273 = smul.u32 2, %s23
        %p274 = scmp.lt.s32.totalorder %s22, 0
        %s275 = scalar_select %p274, %s22, 0
        %p276 = scmp.lt.s32.totalorder %s273, 3
        %s277 = scalar_select %p276, %s273, 3
        %s278 = smul.addr %s275, 4
        %s279 = sadd.s32 %s277, %s278
        %s280 = smul.addr %s279, 8
        %s281 = scalar_lea.vmem %s3, %s280
        %s282 = smul.u32 2, %s23
        %p283 = scmp.eq.s32.totalorder %s24, 0
        // Predicated region
        $region37: #{_lambda_.1} parent=31 // pred_check
          %p284 = pneg %p283
        $region38: #{_lambda_.1} parent=31 // pred_check_branch
          %286 = sbr.rel (%p284) target = $region40
        $region39: #{_lambda_.1} parent=31 // pred_region
          %287 = vst [vmem:[#allocation2] sm:$0xff] 0.0
          %288 = vst [vmem:[#allocation2 + $0x8] sm:$0xff] 0.0
        $region40: #{_lambda_.1} parent=31 // pred_fallthru
          _
        %v289 = vld [vmem:[#allocation2] sm:$0xff]
        %v290 = vld [vmem:[#allocation2 + $0x8] sm:$0xff]
        %v291 = vld [vmem:[%s264] sm:$0xff]
        %v292 = vld [vmem:[%s264 + $0x8] sm:$0xff]
        %v293 = vld [vmem:[%s264 + $0x10] sm:$0xff]
        %v294 = vld [vmem:[%s264 + $0x18] sm:$0xff]
        %v295 = vld [vmem:[%s216] sm:$0xff]
        %v296 = vld [vmem:[%s216 + $0x8] sm:$0xff]
        %v297 = vld [vmem:[%s216 + $0x10] sm:$0xff]
        %v298 = vld [vmem:[%s216 + $0x18] sm:$0xff]
        %v299 = vld [vmem:[%s216 + $0x20] sm:$0xff]
        %v300 = vld [vmem:[%s216 + $0x28] sm:$0xff]
        %v301 = vld [vmem:[%s216 + $0x30] sm:$0xff]
        %v302 = vld [vmem:[%s216 + $0x38] sm:$0xff]
        %v303 = vld [vmem:[%s216 + $0x40] sm:$0xff]
        %v304 = vld [vmem:[%s216 + $0x48] sm:$0xff]
        %v305 = vld [vmem:[%s216 + $0x50] sm:$0xff]
        %v306 = vld [vmem:[%s216 + $0x58] sm:$0xff]
        %v307 = vld [vmem:[%s216 + $0x60] sm:$0xff]
        %v308 = vld [vmem:[%s216 + $0x68] sm:$0xff]
        %v309 = vld [vmem:[%s216 + $0x70] sm:$0xff]
        %v310 = vld [vmem:[%s216 + $0x78] sm:$0xff]
        %v311 = vld [vmem:[%s216 + $0x80] sm:$0xff]
        %v312 = vld [vmem:[%s216 + $0x88] sm:$0xff]
        %v313 = vld [vmem:[%s216 + $0x90] sm:$0xff]
        %v314 = vld [vmem:[%s216 + $0x98] sm:$0xff]
        %v315 = vld [vmem:[%s216 + $0xa0] sm:$0xff]
        %v316 = vld [vmem:[%s216 + $0xa8] sm:$0xff]
        %v317 = vld [vmem:[%s216 + $0xb0] sm:$0xff]
        %v318 = vld [vmem:[%s216 + $0xb8] sm:$0xff]
        %v319 = vld [vmem:[%s216 + $0xc0] sm:$0xff]
        %v320 = vld [vmem:[%s216 + $0xc8] sm:$0xff]
        %v321 = vld [vmem:[%s216 + $0xd0] sm:$0xff]
        %v322 = vld [vmem:[%s216 + $0xd8] sm:$0xff]
        %v323 = vld [vmem:[%s216 + $0xe0] sm:$0xff]
        %v324 = vld [vmem:[%s216 + $0xe8] sm:$0xff]
        %v325 = vld [vmem:[%s216 + $0xf0] sm:$0xff]
        %v326 = vld [vmem:[%s216 + $0xf8] sm:$0xff]
        %v327 = vld [vmem:[%s216 + $0x100] sm:$0xff]
        %v328 = vld [vmem:[%s216 + $0x108] sm:$0xff]
        %v329 = vld [vmem:[%s216 + $0x110] sm:$0xff]
        %v330 = vld [vmem:[%s216 + $0x118] sm:$0xff]
        %v331 = vld [vmem:[%s216 + $0x120] sm:$0xff]
        %v332 = vld [vmem:[%s216 + $0x128] sm:$0xff]
        %v333 = vld [vmem:[%s216 + $0x130] sm:$0xff]
        %v334 = vld [vmem:[%s216 + $0x138] sm:$0xff]
        %v335 = vld [vmem:[%s216 + $0x140] sm:$0xff]
        %v336 = vld [vmem:[%s216 + $0x148] sm:$0xff]
        %v337 = vld [vmem:[%s216 + $0x150] sm:$0xff]
        %v338 = vld [vmem:[%s216 + $0x158] sm:$0xff]
        %v339 = vld [vmem:[%s216 + $0x160] sm:$0xff]
        %v340 = vld [vmem:[%s216 + $0x168] sm:$0xff]
        %v341 = vld [vmem:[%s216 + $0x170] sm:$0xff]
        %v342 = vld [vmem:[%s216 + $0x178] sm:$0xff]
        %v343 = vld [vmem:[%s216 + $0x180] sm:$0xff]
        %v344 = vld [vmem:[%s216 + $0x188] sm:$0xff]
        %v345 = vld [vmem:[%s216 + $0x190] sm:$0xff]
        %v346 = vld [vmem:[%s216 + $0x198] sm:$0xff]
        %v347 = vld [vmem:[%s216 + $0x1a0] sm:$0xff]
        %v348 = vld [vmem:[%s216 + $0x1a8] sm:$0xff]
        %v349 = vld [vmem:[%s216 + $0x1b0] sm:$0xff]
        %v350 = vld [vmem:[%s216 + $0x1b8] sm:$0xff]
        %v351 = vld [vmem:[%s216 + $0x1c0] sm:$0xff]
        %v352 = vld [vmem:[%s216 + $0x1c8] sm:$0xff]
        %v353 = vld [vmem:[%s216 + $0x1d0] sm:$0xff]
        %v354 = vld [vmem:[%s216 + $0x1d8] sm:$0xff]
        %v355 = vld [vmem:[%s216 + $0x1e0] sm:$0xff]
        %v356 = vld [vmem:[%s216 + $0x1e8] sm:$0xff]
        %v357 = vld [vmem:[%s216 + $0x1f0] sm:$0xff]
        %v358 = vld [vmem:[%s216 + $0x1f8] sm:$0xff]
        %v359 = vld [vmem:[%s216 + $0x200] sm:$0xff]
        %v360 = vld [vmem:[%s216 + $0x208] sm:$0xff]
        %v361 = vld [vmem:[%s216 + $0x210] sm:$0xff]
        %v362 = vld [vmem:[%s216 + $0x218] sm:$0xff]
        %v363 = vld [vmem:[%s216 + $0x220] sm:$0xff]
        %v364 = vld [vmem:[%s216 + $0x228] sm:$0xff]
        %v365 = vld [vmem:[%s216 + $0x230] sm:$0xff]
        %v366 = vld [vmem:[%s216 + $0x238] sm:$0xff]
        %v367 = vld [vmem:[%s216 + $0x240] sm:$0xff]
        %v368 = vld [vmem:[%s216 + $0x248] sm:$0xff]
        %v369 = vld [vmem:[%s216 + $0x250] sm:$0xff]
        %v370 = vld [vmem:[%s216 + $0x258] sm:$0xff]
        %v371 = vld [vmem:[%s216 + $0x260] sm:$0xff]
        %v372 = vld [vmem:[%s216 + $0x268] sm:$0xff]
        %v373 = vld [vmem:[%s216 + $0x270] sm:$0xff]
        %v374 = vld [vmem:[%s216 + $0x278] sm:$0xff]
        %v375 = vld [vmem:[%s216 + $0x280] sm:$0xff]
        %v376 = vld [vmem:[%s216 + $0x288] sm:$0xff]
        %v377 = vld [vmem:[%s216 + $0x290] sm:$0xff]
        %v378 = vld [vmem:[%s216 + $0x298] sm:$0xff]
        %v379 = vld [vmem:[%s216 + $0x2a0] sm:$0xff]
        %v380 = vld [vmem:[%s216 + $0x2a8] sm:$0xff]
        %v381 = vld [vmem:[%s216 + $0x2b0] sm:$0xff]
        %v382 = vld [vmem:[%s216 + $0x2b8] sm:$0xff]
        %v383 = vld [vmem:[%s216 + $0x2c0] sm:$0xff]
        %v384 = vld [vmem:[%s216 + $0x2c8] sm:$0xff]
        %v385 = vld [vmem:[%s216 + $0x2d0] sm:$0xff]
        %v386 = vld [vmem:[%s216 + $0x2d8] sm:$0xff]
        %v387 = vld [vmem:[%s216 + $0x2e0] sm:$0xff]
        %v388 = vld [vmem:[%s216 + $0x2e8] sm:$0xff]
        %v389 = vld [vmem:[%s216 + $0x2f0] sm:$0xff]
        %v390 = vld [vmem:[%s216 + $0x2f8] sm:$0xff]
        %v391 = vld [vmem:[%s216 + $0x300] sm:$0xff]
        %v392 = vld [vmem:[%s216 + $0x308] sm:$0xff]
        %v393 = vld [vmem:[%s216 + $0x310] sm:$0xff]
        %v394 = vld [vmem:[%s216 + $0x318] sm:$0xff]
        %v395 = vld [vmem:[%s216 + $0x320] sm:$0xff]
        %v396 = vld [vmem:[%s216 + $0x328] sm:$0xff]
        %v397 = vld [vmem:[%s216 + $0x330] sm:$0xff]
        %v398 = vld [vmem:[%s216 + $0x338] sm:$0xff]
        %v399 = vld [vmem:[%s216 + $0x340] sm:$0xff]
        %v400 = vld [vmem:[%s216 + $0x348] sm:$0xff]
        %v401 = vld [vmem:[%s216 + $0x350] sm:$0xff]
        %v402 = vld [vmem:[%s216 + $0x358] sm:$0xff]
        %v403 = vld [vmem:[%s216 + $0x360] sm:$0xff]
        %v404 = vld [vmem:[%s216 + $0x368] sm:$0xff]
        %v405 = vld [vmem:[%s216 + $0x370] sm:$0xff]
        %v406 = vld [vmem:[%s216 + $0x378] sm:$0xff]
        %v407 = vld [vmem:[%s216 + $0x380] sm:$0xff]
        %v408 = vld [vmem:[%s216 + $0x388] sm:$0xff]
        %v409 = vld [vmem:[%s216 + $0x390] sm:$0xff]
        %v410 = vld [vmem:[%s216 + $0x398] sm:$0xff]
        %v411 = vld [vmem:[%s216 + $0x3a0] sm:$0xff]
        %v412 = vld [vmem:[%s216 + $0x3a8] sm:$0xff]
        %v413 = vld [vmem:[%s216 + $0x3b0] sm:$0xff]
        %v414 = vld [vmem:[%s216 + $0x3b8] sm:$0xff]
        %v415 = vld [vmem:[%s216 + $0x3c0] sm:$0xff]
        %v416 = vld [vmem:[%s216 + $0x3c8] sm:$0xff]
        %v417 = vld [vmem:[%s216 + $0x3d0] sm:$0xff]
        %v418 = vld [vmem:[%s216 + $0x3d8] sm:$0xff]
        %v419 = vld [vmem:[%s216 + $0x3e0] sm:$0xff]
        %v420 = vld [vmem:[%s216 + $0x3e8] sm:$0xff]
        %v421 = vld [vmem:[%s216 + $0x3f0] sm:$0xff]
        %v422 = vld [vmem:[%s216 + $0x3f8] sm:$0xff]
        %423 = vmatprep.subr.mxu0 %v296
        %424 = vmatpush1.msra.mxu0 %v295
        %425 = vmatprep.subr.mxu0 %v298
        %426 = vmatpush1.msra.mxu0 %v297
        %427 = vmatprep.subr.mxu0 %v300
        %428 = vmatpush1.msra.mxu0 %v299
        %429 = vmatprep.subr.mxu0 %v302
        %430 = vmatpush1.msra.mxu0 %v301
        %431 = vmatprep.subr.mxu0 %v304
        %432 = vmatpush1.msra.mxu0 %v303
        %433 = vmatprep.subr.mxu0 %v306
        %434 = vmatpush1.msra.mxu0 %v305
        %435 = vmatprep.subr.mxu0 %v308
        %436 = vmatpush1.msra.mxu0 %v307
        %437 = vmatprep.subr.mxu0 %v310
        %438 = vmatpush1.msra.mxu0 %v309
        %439 = vmatprep.subr.mxu0 %v312
        %440 = vmatpush1.msra.mxu0 %v311
        %441 = vmatprep.subr.mxu0 %v314
        %442 = vmatpush1.msra.mxu0 %v313
        %443 = vmatprep.subr.mxu0 %v316
        %444 = vmatpush1.msra.mxu0 %v315
        %445 = vmatprep.subr.mxu0 %v318
        %446 = vmatpush1.msra.mxu0 %v317
        %447 = vmatprep.subr.mxu0 %v320
        %448 = vmatpush1.msra.mxu0 %v319
        %449 = vmatprep.subr.mxu0 %v322
        %450 = vmatpush1.msra.mxu0 %v321
        %451 = vmatprep.subr.mxu0 %v324
        %452 = vmatpush1.msra.mxu0 %v323
        %453 = vmatprep.subr.mxu0 %v326
        %454 = vmatpush1.msra.mxu0 %v325
        %455 = vmatprep.subr.mxu0 %v328
        %456 = vmatpush1.msra.mxu0 %v327
        %457 = vmatprep.subr.mxu0 %v330
        %458 = vmatpush1.msra.mxu0 %v329
        %459 = vmatprep.subr.mxu0 %v332
        %460 = vmatpush1.msra.mxu0 %v331
        %461 = vmatprep.subr.mxu0 %v334
        %462 = vmatpush1.msra.mxu0 %v333
        %463 = vmatprep.subr.mxu0 %v336
        %464 = vmatpush1.msra.mxu0 %v335
        %465 = vmatprep.subr.mxu0 %v338
        %466 = vmatpush1.msra.mxu0 %v337
        %467 = vmatprep.subr.mxu0 %v340
        %468 = vmatpush1.msra.mxu0 %v339
        %469 = vmatprep.subr.mxu0 %v342
        %470 = vmatpush1.msra.mxu0 %v341
        %471 = vmatprep.subr.mxu0 %v344
        %472 = vmatpush1.msra.mxu0 %v343
        %473 = vmatprep.subr.mxu0 %v346
        %474 = vmatpush1.msra.mxu0 %v345
        %475 = vmatprep.subr.mxu0 %v348
        %476 = vmatpush1.msra.mxu0 %v347
        %477 = vmatprep.subr.mxu0 %v350
        %478 = vmatpush1.msra.mxu0 %v349
        %479 = vmatprep.subr.mxu0 %v352
        %480 = vmatpush1.msra.mxu0 %v351
        %481 = vmatprep.subr.mxu0 %v354
        %482 = vmatpush1.msra.mxu0 %v353
        %483 = vmatprep.subr.mxu0 %v356
        %484 = vmatpush1.msra.mxu0 %v355
        %485 = vmatprep.subr.mxu0 %v358
        %486 = vmatpush1.msra.mxu0 %v357
        %487 = vmatprep.mubr.f32.mxu0 %v292
        %488 = vmatmul.mubr.f32.gmra.mrb[0].mxu0 %v291
        %v489 = vpop.f32.mrb[0].mxu0
        %v490 = vadd.f32 0.0, %v489
        %v491 = vpop.f32.mrb[0].mxu0
        %v492 = vadd.f32 0.0, %v491
        %493 = vdwg.mxu0
        %494 = vmatprep.subr.mxu0 %v360
        %495 = vmatpush1.msra.mxu0 %v359
        %496 = vmatprep.subr.mxu0 %v362
        %497 = vmatpush1.msra.mxu0 %v361
        %498 = vmatprep.subr.mxu0 %v364
        %499 = vmatpush1.msra.mxu0 %v363
        %500 = vmatprep.subr.mxu0 %v366
        %501 = vmatpush1.msra.mxu0 %v365
        %502 = vmatprep.subr.mxu0 %v368
        %503 = vmatpush1.msra.mxu0 %v367
        %504 = vmatprep.subr.mxu0 %v370
        %505 = vmatpush1.msra.mxu0 %v369
        %506 = vmatprep.subr.mxu0 %v372
        %507 = vmatpush1.msra.mxu0 %v371
        %508 = vmatprep.subr.mxu0 %v374
        %509 = vmatpush1.msra.mxu0 %v373
        %510 = vmatprep.subr.mxu0 %v376
        %511 = vmatpush1.msra.mxu0 %v375
        %512 = vmatprep.subr.mxu0 %v378
        %513 = vmatpush1.msra.mxu0 %v377
        %514 = vmatprep.subr.mxu0 %v380
        %515 = vmatpush1.msra.mxu0 %v379
        %516 = vmatprep.subr.mxu0 %v382
        %517 = vmatpush1.msra.mxu0 %v381
        %518 = vmatprep.subr.mxu0 %v384
        %519 = vmatpush1.msra.mxu0 %v383
        %520 = vmatprep.subr.mxu0 %v386
        %521 = vmatpush1.msra.mxu0 %v385
        %522 = vmatprep.subr.mxu0 %v388
        %523 = vmatpush1.msra.mxu0 %v387
        %524 = vmatprep.subr.mxu0 %v390
        %525 = vmatpush1.msra.mxu0 %v389
        %526 = vmatprep.subr.mxu0 %v392
        %527 = vmatpush1.msra.mxu0 %v391
        %528 = vmatprep.subr.mxu0 %v394
        %529 = vmatpush1.msra.mxu0 %v393
        %530 = vmatprep.subr.mxu0 %v396
        %531 = vmatpush1.msra.mxu0 %v395
        %532 = vmatprep.subr.mxu0 %v398
        %533 = vmatpush1.msra.mxu0 %v397
        %534 = vmatprep.subr.mxu0 %v400
        %535 = vmatpush1.msra.mxu0 %v399
        %536 = vmatprep.subr.mxu0 %v402
        %537 = vmatpush1.msra.mxu0 %v401
        %538 = vmatprep.subr.mxu0 %v404
        %539 = vmatpush1.msra.mxu0 %v403
        %540 = vmatprep.subr.mxu0 %v406
        %541 = vmatpush1.msra.mxu0 %v405
        %542 = vmatprep.subr.mxu0 %v408
        %543 = vmatpush1.msra.mxu0 %v407
        %544 = vmatprep.subr.mxu0 %v410
        %545 = vmatpush1.msra.mxu0 %v409
        %546 = vmatprep.subr.mxu0 %v412
        %547 = vmatpush1.msra.mxu0 %v411
        %548 = vmatprep.subr.mxu0 %v414
        %549 = vmatpush1.msra.mxu0 %v413
        %550 = vmatprep.subr.mxu0 %v416
        %551 = vmatpush1.msra.mxu0 %v415
        %552 = vmatprep.subr.mxu0 %v418
        %553 = vmatpush1.msra.mxu0 %v417
        %554 = vmatprep.subr.mxu0 %v420
        %555 = vmatpush1.msra.mxu0 %v419
        %556 = vmatprep.subr.mxu0 %v422
        %557 = vmatpush1.msra.mxu0 %v421
        %558 = vmatprep.mubr.f32.mxu0 %v294
        %559 = vmatmul.mubr.f32.gmra.mrb[0].mxu0 %v293
        %v560 = vpop.f32.mrb[0].mxu0
        %v561 = vadd.f32 %v490, %v560
        %v562 = vpop.f32.mrb[0].mxu0
        %v563 = vadd.f32 %v492, %v562
        %564 = vdwg.mxu0
        %v565 = vadd.f32 %v289, %v561
        %v566 = vadd.f32 %v290, %v563
        %567 = vst [vmem:[#allocation2] sm:$0xff] %v565
        %568 = vst [vmem:[#allocation2 + $0x8] sm:$0xff] %v566
        // Predicated region
        $region41: #{_lambda_.1} parent=31 // pred_check
          %p569 = pneg %p283
        $region42: #{_lambda_.1} parent=31 // pred_check_branch
          %571 = sbr.rel (%p569) target = $region44
        $region43: #{_lambda_.1} parent=31 // pred_region
          %v572 = vld [vmem:[#allocation2] sm:$0xff]
          %v573 = vld [vmem:[#allocation2 + $0x8] sm:$0xff]
          %v574 = vld [vmem:[%s271] sm:$0x3]
          %v576 = vlaneseq
          %v577 = vshrl.u32 %v576, 7
          %v578 = vsub.s32 0, %v577
          %v579 = vrot.slane %v574, %v578
          %v580 = vlaneseq
          %v581 = vshrl.u32 %v580, 7
          %v582 = vsub.s32 1, %v581
          %v583 = vrot.slane %v574, %v582
          %v586 = vadd.f32 %v572, %v579
          %v587 = vadd.f32 %v573, %v583
          %588 = vst [vmem:[%s281] sm:$0xff] %v586
          %589 = vst [vmem:[%s281 + $0x8] sm:$0xff] %v587
        $region44: #{_lambda_.1} parent=31 // pred_fallthru
          _
        %s590 = smul.u32 2, %s23
        %p591 = scmp.lt.s32.totalorder %s22, 0
        %s592 = scalar_select %p591, %s22, 0
        %p593 = scmp.lt.s32.totalorder %s590, 3
        %s594 = scalar_select %p593, %s590, 3
        %s595 = smul.addr %s592, 4
        %s596 = sadd.s32 %s594, %s595
        %s597 = smul.addr %s596, 8
        %s598 = scalar_lea.vmem %s3, %s597
        // Predicated region
        $region45: #{_lambda_.1} parent=31 // pred_check
          %p599 = pneg %p138
        $region46: #{_lambda_.1} parent=31 // pred_check_branch
          %601 = sbr.rel (%p599) target = $region48
        $region47: #{_lambda_.1} parent=31 // pred_region
          %s602 = smul.u32 2, %s23
        $region48: #{_lambda_.1} parent=31 // pred_fallthru
          _
      $region32: #{_lambda_.1} parent=5 // pred_fallthru
        _
      %p603 = scmp.le.s32.totalorder 2, %s12
      // Predicated region
      $region49: #{_lambda_.1} parent=5 // pred_check
        %p604 = pneg %p603
      $region50: #{_lambda_.1} parent=5 // pred_check_branch
        %606 = sbr.rel (%p604) target = $region52
      $region51: #{_lambda_.1} parent=5 // pred_region
        %s607 = ssub.s32 %s12, 2
        // Predicated region
        $region53: #{_lambda_.1} parent=51 // pred_check
          %p608 = pneg %p144
        $region54: #{_lambda_.1} parent=51 // pred_check_branch
          %610 = sbr.rel (%p608) target = $region56
        $region55: #{_lambda_.1} parent=51 // pred_region
          %s611 = smul.u32 2, %s26
          %p612 = scmp.lt.s32.totalorder %s25, 0
          %s613 = scalar_select %p612, %s25, 0
          %p614 = scmp.lt.s32.totalorder %s611, 3
          %s615 = scalar_select %p614, %s611, 3
          %s616 = smul.addr %s613, 4
          %s617 = sadd.s32 %s615, %s616
          %s618 = smul.addr %s617, 8
          %s619 = scalar_lea.vmem %s3, %s618
        $region56: #{_lambda_.1} parent=51 // pred_fallthru
          _
      $region52: #{_lambda_.1} parent=5 // pred_fallthru
        _
    $region6: #{_lambda_.1} parent=1 // loop_footer
      %s16 = sadd.s32 1, %s12
    $region7: #{_lambda_.1} parent=1 // loop_footer_branch
      %11 = sbr.rel target = $region3
    $region8: #{_lambda_.1} parent=1 // loop_exit
      _
    %620 = vsyncpa [#allocation4], 1
    %s621 = scalar_lea.sflag [#allocation4], 1
    %622 = vsyncpa %s621, 1

</llo_original>
